<compile_context>
chip_gen: v5e
topology: v5e:2x2
jax: 0.10.0
libtpu: 0.0.40
codegen_flags: <defaults>
</compile_context>

<pallas_src>
import jax
import jax.numpy as jnp
from jax import lax
from jax.experimental import pallas as pl
from jax.experimental.pallas import tpu as pltpu

_LANE = 128
_SUBLANE = 8


def _round_up(n, m):
    return ((n + m - 1) // m) * m


# --------------------------------------------------------------------------- kernel
def _make_kernel(h_pad, a_pad, out_pad, action_dim):
    def kernel(x_ref, w1_ref, w2_ref, wh_ref, b_ref, out_ref):
        x = x_ref[...]                                                # (TB, S_pad)

        # packed bias slab: row 0 = b1, row 1 = b2, row 2 = [bmu | bsigma]
        b1 = b_ref[0:1, :h_pad]
        b2 = b_ref[1:2, :a_pad]
        bh = b_ref[2:3, :out_pad]

        # ---- self.model : 2-layer ReLU MLP ----
        h = jnp.dot(x, w1_ref[...], preferred_element_type=jnp.float32) + b1
        h = jnp.maximum(h, 0.0)
        logits = jnp.dot(h, w2_ref[...], preferred_element_type=jnp.float32) + b2

        # ---- fused mu|sigma head: single MXU pass ----
        pre = jnp.dot(logits, wh_ref[...], preferred_element_type=jnp.float32) + bh

        # lanes [0, A) -> tanh (mu), lanes [A, out_pad) -> exp (sigma + harmless pad)
        lane = lax.broadcasted_iota(jnp.int32, pre.shape, 1)
        out_ref[...] = jnp.where(lane < action_dim, jnp.tanh(pre), jnp.exp(pre))

    return kernel


# --------------------------------------------------------------------------- packing
def pack_params(params):
    """Pad + fuse raw (torch-layout) params once, at param-load time."""
    w1, b1, w2, b2, wmu, bmu, wsg, bsg = params
    state_dim, hidden_dim = w1.shape
    action_dim = wmu.shape[1]

    s_pad = _round_up(state_dim, _LANE)
    h_pad = _round_up(hidden_dim, _LANE)
    a_pad = _round_up(action_dim, _LANE)
    out_pad = _round_up(2 * action_dim, _LANE)
    b_width = max(h_pad, a_pad, out_pad)

    def pad2(a, rows, cols):
        a = jnp.asarray(a, jnp.float32)
        return jnp.zeros((rows, cols), jnp.float32).at[: a.shape[0], : a.shape[1]].set(a)

    w1p = pad2(w1, s_pad, h_pad)
    w2p = pad2(w2, h_pad, a_pad)
    whp = pad2(jnp.concatenate([wmu, wsg], axis=1), a_pad, out_pad)   # fused head

    b_all = jnp.zeros((3, b_width), jnp.float32)
    b_all = b_all.at[0, :hidden_dim].set(jnp.asarray(b1, jnp.float32).reshape(-1))
    b_all = b_all.at[1, :action_dim].set(jnp.asarray(b2, jnp.float32).reshape(-1))
    b_all = b_all.at[2, :action_dim].set(jnp.asarray(bmu, jnp.float32).reshape(-1))
    b_all = b_all.at[2, action_dim:2 * action_dim].set(
        jnp.asarray(bsg, jnp.float32).reshape(-1))

    dims = dict(state_dim=state_dim, hidden_dim=hidden_dim, action_dim=action_dim,
                s_pad=s_pad, h_pad=h_pad, a_pad=a_pad, out_pad=out_pad)
    return (w1p, w2p, whp, b_all), dims


# --------------------------------------------------------------------------- forward
def actor_prob_forward(s, packed, dims, tile_b_max=512):
    """Mirrors ActorProb.forward: returns ((mu, sigma), None)."""
    w1p, w2p, whp, b_all = packed
    A = dims["action_dim"]
    s_pad, h_pad, a_pad, out_pad = dims["s_pad"], dims["h_pad"], dims["a_pad"], dims["out_pad"]

    batch = s.shape[0]
    x = s.reshape(batch, -1).astype(jnp.float32)          # s.view(batch, -1)

    # batch tiling: single padded tile for small B, 512-row tiles (parallel grid) otherwise
    tile_b = _round_up(batch, _SUBLANE) if batch <= tile_b_max else tile_b_max
    b_pad = _round_up(batch, tile_b)
    x_pad = jnp.zeros((b_pad, s_pad), jnp.float32).at[:batch, : x.shape[1]].set(x)

    kernel = _make_kernel(h_pad, a_pad, out_pad, A)

    flops = 2 * batch * (dims["state_dim"] * dims["hidden_dim"]
                         + dims["hidden_dim"] * A + A * 2 * A)
    bytes_accessed = 4 * (x_pad.size + w1p.size + w2p.size + whp.size
                          + b_all.size + b_pad * out_pad)

    out = pl.pallas_call(
        kernel,
        out_shape=jax.ShapeDtypeStruct((b_pad, out_pad), jnp.float32),
        grid=(b_pad // tile_b,),
        in_specs=[
            pl.BlockSpec((tile_b, s_pad), lambda i: (i, 0)),     # x: tiled on batch
            pl.BlockSpec(w1p.shape, lambda i: (0, 0)),           # weights stay VMEM-resident
            pl.BlockSpec(w2p.shape, lambda i: (0, 0)),
            pl.BlockSpec(whp.shape, lambda i: (0, 0)),
            pl.BlockSpec(b_all.shape, lambda i: (0, 0)),
        ],
        out_specs=pl.BlockSpec((tile_b, out_pad), lambda i: (i, 0)),
        compiler_params=pltpu.CompilerParams(dimension_semantics=("parallel",)),
        cost_estimate=pl.CostEstimate(flops=flops,
                                      transcendentals=2 * batch * A,
                                      bytes_accessed=bytes_accessed),
    )(x_pad, w1p, w2p, whp, b_all)

    mu = out[:batch, :A]
    sigma = out[:batch, A:2 * A]
    return (mu, sigma), None


# --------------------------------------------------------------------------- init / ref
def init_params(key, state_dim, hidden_dim, action_dim):
    """Deterministic torch-nn.Linear-style init (uniform +-1/sqrt(fan_in))."""
    def linear(k, fan_in, fan_out):
        kw, kb = jax.random.split(k)
        bound = 1.0 / jnp.sqrt(jnp.float32(fan_in))
        w = jax.random.uniform(kw, (fan_in, fan_out), jnp.float32, -bound, bound)
        b = jax.random.uniform(kb, (1, fan_out), jnp.float32, -bound, bound)
        return w, b

    k1, k2, k3, k4 = jax.random.split(key, 4)
    w1, b1 = linear(k1, state_dim, hidden_dim)     # model layer 1
    w2, b2 = linear(k2, hidden_dim, action_dim)    # model layer 2 -> logits
    wmu, bmu = linear(k3, action_dim, action_dim)  # self.mu
    wsg, bsg = linear(k4, action_dim, action_dim)  # self.sigma
    return (w1, b1, w2, b2, wmu, bmu, wsg, bsg)


def reference_forward(s, params):
    w1, b1, w2, b2, wmu, bmu, wsg, bsg = params
    x = s.reshape(s.shape[0], -1).astype(jnp.float32)
    h = jnp.maximum(x @ w1 + b1, 0.0)
    logits = h @ w2 + b2
    return jnp.tanh(logits @ wmu + bmu), jnp.exp(logits @ wsg + bsg)


# --------------------------------------------------------------------------- main
if __name__ == "__main__":
    key = jax.random.PRNGKey(0)
    k_s, k_p = jax.random.split(key)

    # small, module-consistent shapes: batch=2, state = (channels=4, nodes=16)
    B, C, N = 2, 4, 16
    state_dim = C * N            # 64 after flatten
    hidden_dim = 32
    action_dim = 8               # np.prod(action_shape)

    s = jax.random.normal(k_s, (B, C, N), dtype=jnp.float32)
    params = init_params(k_p, state_dim, hidden_dim, action_dim)
    packed, dims = pack_params(params)

    (mu, sigma), state = actor_prob_forward(s, packed, dims)
    jax.block_until_ready((mu, sigma))

    assert mu.shape == (B, action_dim) and sigma.shape == (B, action_dim)
    assert state is None
    # sanity: mu bounded by tanh, sigma strictly positive from exp
    assert bool(jnp.all(jnp.abs(mu) <= 1.0)) and bool(jnp.all(sigma > 0.0))
    # agreement with a plain-JAX reference of the same fp32 math
    mu_ref, sg_ref = reference_forward(s, params)
    assert bool(jnp.allclose(mu, mu_ref, rtol=2e-2, atol=2e-2))
    assert bool(jnp.allclose(sigma, sg_ref, rtol=2e-2, atol=2e-2))

    print("KERNEL_OK")
</pallas_src>

<mosaic_0001>
module attributes {stable_mosaic.version = 11 : i64} {
  func.func @kernel(%arg0: i32, %arg1: memref<8x128xf32, #tpu.memory_space<vmem>>, %arg2: memref<128x128xf32, #tpu.memory_space<vmem>>, %arg3: memref<128x128xf32, #tpu.memory_space<vmem>>, %arg4: memref<128x128xf32, #tpu.memory_space<vmem>>, %arg5: memref<3x128xf32, #tpu.memory_space<vmem>>, %arg6: memref<8x128xf32, #tpu.memory_space<vmem>>) attributes {dimension_semantics = [#tpu.dimension_semantics<parallel>], iteration_bounds = array<i64: 1>, scalar_prefetch = 0 : i64, scratch_operands = 0 : i64, tpu.core_type = #tpu.core_type<tc>, window_params = [{transform_indices = @transform_0, window_bounds = array<i64: 8, 128>}, {pipeline_mode = #tpu.pipeline_mode<synchronous>, transform_indices = @transform_1, window_bounds = array<i64: 128, 128>}, {pipeline_mode = #tpu.pipeline_mode<synchronous>, transform_indices = @transform_2, window_bounds = array<i64: 128, 128>}, {pipeline_mode = #tpu.pipeline_mode<synchronous>, transform_indices = @transform_3, window_bounds = array<i64: 128, 128>}, {pipeline_mode = #tpu.pipeline_mode<synchronous>, transform_indices = @transform_4, window_bounds = array<i64: 3, 128>}, {transform_indices = @transform_5, window_bounds = array<i64: 8, 128>}]} {
    %c0 = arith.constant 0 : index
    %c0_0 = arith.constant 0 : index
    %0 = vector.load %arg1[%c0, %c0_0] : memref<8x128xf32, #tpu.memory_space<vmem>>, vector<8x128xf32>
    %c0_1 = arith.constant 0 : index
    %c0_2 = arith.constant 0 : index
    %1 = vector.load %arg5[%c0_1, %c0_2] : memref<3x128xf32, #tpu.memory_space<vmem>>, vector<1x128xf32>
    %c1 = arith.constant 1 : index
    %c0_3 = arith.constant 0 : index
    %2 = vector.load %arg5[%c1, %c0_3] : memref<3x128xf32, #tpu.memory_space<vmem>>, vector<1x128xf32>
    %c2 = arith.constant 2 : index
    %c0_4 = arith.constant 0 : index
    %3 = vector.load %arg5[%c2, %c0_4] : memref<3x128xf32, #tpu.memory_space<vmem>>, vector<1x128xf32>
    %c0_5 = arith.constant 0 : index
    %c0_6 = arith.constant 0 : index
    %4 = vector.load %arg2[%c0_5, %c0_6] : memref<128x128xf32, #tpu.memory_space<vmem>>, vector<128x128xf32>
    %cst = arith.constant dense<0.000000e+00> : vector<8x128xf32>
    %5 = tpu.matmul %0, %4, %cst {dimension_numbers = #tpu.dot_dimension_numbers<[1], [0], [0], [1], [0, 0, 1, 1], [], []>} : vector<8x128xf32>, vector<128x128xf32>, vector<8x128xf32> -> vector<8x128xf32>
    %6 = vector.broadcast %1 : vector<1x128xf32> to vector<8x128xf32>
    %7 = arith.addf %5, %6 : vector<8x128xf32>
    %cst_7 = arith.constant 0.000000e+00 : f32
    %8 = vector.broadcast %cst_7 : f32 to vector<8x128xf32>
    %9 = arith.maximumf %7, %8 : vector<8x128xf32>
    %c0_8 = arith.constant 0 : index
    %c0_9 = arith.constant 0 : index
    %10 = vector.load %arg3[%c0_8, %c0_9] : memref<128x128xf32, #tpu.memory_space<vmem>>, vector<128x128xf32>
    %cst_10 = arith.constant dense<0.000000e+00> : vector<8x128xf32>
    %11 = tpu.matmul %9, %10, %cst_10 {dimension_numbers = #tpu.dot_dimension_numbers<[1], [0], [0], [1], [0, 0, 1, 1], [], []>} : vector<8x128xf32>, vector<128x128xf32>, vector<8x128xf32> -> vector<8x128xf32>
    %12 = vector.broadcast %2 : vector<1x128xf32> to vector<8x128xf32>
    %13 = arith.addf %11, %12 : vector<8x128xf32>
    %c0_11 = arith.constant 0 : index
    %c0_12 = arith.constant 0 : index
    %14 = vector.load %arg4[%c0_11, %c0_12] : memref<128x128xf32, #tpu.memory_space<vmem>>, vector<128x128xf32>
    %cst_13 = arith.constant dense<0.000000e+00> : vector<8x128xf32>
    %15 = tpu.matmul %13, %14, %cst_13 {dimension_numbers = #tpu.dot_dimension_numbers<[1], [0], [0], [1], [0, 0, 1, 1], [], []>} : vector<8x128xf32>, vector<128x128xf32>, vector<8x128xf32> -> vector<8x128xf32>
    %16 = vector.broadcast %3 : vector<1x128xf32> to vector<8x128xf32>
    %17 = arith.addf %15, %16 : vector<8x128xf32>
    %18 = tpu.iota {dimensions = array<i32: 1>} : vector<8x128xi32>
    %c8_i32 = arith.constant 8 : i32
    %19 = vector.broadcast %c8_i32 : i32 to vector<8x128xi32>
    %20 = arith.cmpi slt, %18, %19 : vector<8x128xi32>
    %21 = math.tanh %17 : vector<8x128xf32>
    %22 = math.exp %17 : vector<8x128xf32>
    %23 = arith.select %20, %21, %22 : vector<8x128xi1>, vector<8x128xf32>
    %c0_14 = arith.constant 0 : index
    %c0_15 = arith.constant 0 : index
    %24 = vector.load %arg6[%c0_14, %c0_15] : memref<8x128xf32, #tpu.memory_space<vmem>>, vector<8x128xf32>
    tpu.vector_store %arg6[%c0_14, %c0_15], %23 {strides = array<i32>} : memref<8x128xf32, #tpu.memory_space<vmem>>, vector<8x128xf32>,
    return
  }
  func.func @transform_0(%arg0: i32) -> (i32, i32) {
    %c0_i32 = arith.constant 0 : i32
    %c0_i32_0 = arith.constant 0 : i32
    return %arg0, %c0_i32 : i32, i32
  }
  func.func @transform_1(%arg0: i32) -> (i32, i32) {
    %c0_i32 = arith.constant 0 : i32
    %c0_i32_0 = arith.constant 0 : i32
    %c0_i32_1 = arith.constant 0 : i32
    return %c0_i32, %c0_i32_0 : i32, i32
  }
  func.func @transform_2(%arg0: i32) -> (i32, i32) {
    %c0_i32 = arith.constant 0 : i32
    %c0_i32_0 = arith.constant 0 : i32
    %c0_i32_1 = arith.constant 0 : i32
    return %c0_i32, %c0_i32_0 : i32, i32
  }
  func.func @transform_3(%arg0: i32) -> (i32, i32) {
    %c0_i32 = arith.constant 0 : i32
    %c0_i32_0 = arith.constant 0 : i32
    %c0_i32_1 = arith.constant 0 : i32
    return %c0_i32, %c0_i32_0 : i32, i32
  }
  func.func @transform_4(%arg0: i32) -> (i32, i32) {
    %c0_i32 = arith.constant 0 : i32
    %c0_i32_0 = arith.constant 0 : i32
    %c0_i32_1 = arith.constant 0 : i32
    return %c0_i32, %c0_i32_0 : i32, i32
  }
  func.func @transform_5(%arg0: i32) -> (i32, i32) {
    %c0_i32 = arith.constant 0 : i32
    %c0_i32_0 = arith.constant 0 : i32
    return %arg0, %c0_i32 : i32, i32
  }
}

</mosaic_0001>

<llo_original>
// kernel: tpu_custom_call.1
$region0: #{tpu_custom_call.1}
  #allocation0 [shape = 'u32[]', space=smem, size = 0x4, offset = 0x4, fixed_abs, tag = 'smem constant byte address 0x4 - core index']
  #allocation1 [shape = 'u32[72,128]{1,0:T(1,128)}', space=vmem, size = 0x9000, scoped, tag = 'internal scratch']
  %s0 = inlined_call_operand.hbm [shape: f32[8,128], index: 0, kind: input, shape index: {}]
  %s1 = inlined_call_operand.hbm [shape: f32[128,128], index: 1, kind: input, shape index: {}]
  %s2 = inlined_call_operand.hbm [shape: f32[128,128], index: 2, kind: input, shape index: {}]
  %s3 = inlined_call_operand.hbm [shape: f32[128,128], index: 3, kind: input, shape index: {}]
  %s4 = inlined_call_operand.hbm [shape: f32[3,128], index: 4, kind: input, shape index: {}]
  %s5 = inlined_call_operand.hbm [shape: f32[8,128], index: 5, kind: output, shape index: {}]
  %s6 = sld [smem:[#allocation0]]
  $region50: #{tpu_custom_call.1} parent=0
    _
  %s8 = ssub.s32 1, %s6
  %s9 = scalar_select 0, %s8, %s6
  $region1: #{tpu_custom_call.1} parent=0
    #allocation2 [shape = 'u8[4096]{0}', space=vmem, size = 0x1000, scoped, tag = 'input window, operand 0, single buffered']
    #allocation3 [shape = 's32[1]{0}', space=sflag, size = 0x4, scoped, tag = 'scoped memory for tpu_custom_call.1']
    #allocation4 [shape = 's32[1]{0}', space=sflag, size = 0x4, scoped, tag = 'scoped memory for tpu_custom_call.1']
    #allocation5 [shape = 'u8[65536]{0}', space=vmem, size = 0x10000, scoped, tag = 'input window, operand 1, single buffered']
    #allocation6 [shape = 's32[1]{0}', space=sflag, size = 0x4, scoped, tag = 'scoped memory for tpu_custom_call.1']
    #allocation7 [shape = 'u8[65536]{0}', space=vmem, size = 0x10000, scoped, tag = 'input window, operand 2, single buffered']
    #allocation8 [shape = 'u8[65536]{0}', space=vmem, size = 0x10000, scoped, tag = 'input window, operand 3, single buffered']
    #allocation9 [shape = 's32[1]{0}', space=sflag, size = 0x4, scoped, tag = 'scoped memory for tpu_custom_call.1']
    #allocation10 [shape = 'u8[2048]{0}', space=vmem, size = 0x800, scoped, tag = 'input window, operand 4, single buffered']
    #allocation11 [shape = 'u8[4096]{0}', space=vmem, size = 0x1000, scoped, tag = 'output window, operand 0, single buffered']
    %10 = vsyncpa [#allocation3], 0
    %11 = vsyncpa [#allocation6], 0
    %12 = vsyncpa [#allocation9], 0
    %13 = vsyncpa [#allocation4], 0
    // Predicated region
    $region2: #{tpu_custom_call.1} parent=1 // pred_check
      _
    $region3: #{tpu_custom_call.1} parent=1 // pred_check_branch
      %15 = sbr.rel (0) target = $region5
    $region4: #{tpu_custom_call.1} parent=1 // pred_region
      %17 = vsyncadd [#allocation3], 0
      %s19 = sshll.u32 %s0, 4
      %s20 = int_to_ptr.hbm [resolvable:$true] %s19
      %s21 = sshll.u32 [#allocation2], 4
      %s22 = int_to_ptr.vmem [resolvable:$true] %s21
      %24 = dma.hbm_to_vmem [thread:$0]  %s20, 128, %s22, [#allocation3]
    $region5: #{tpu_custom_call.1} parent=1 // pred_fallthru
      _
    // Predicated region
    $region6: #{tpu_custom_call.1} parent=1 // pred_check
      _
    $region7: #{tpu_custom_call.1} parent=1 // pred_check_branch
      %26 = sbr.rel (0) target = $region9
    $region8: #{tpu_custom_call.1} parent=1 // pred_region
      %28 = vsyncadd [#allocation6], 0
      %s29 = sshll.u32 %s1, 4
      %s30 = int_to_ptr.hbm [resolvable:$true] %s29
      %s31 = sshll.u32 [#allocation5], 4
      %s32 = int_to_ptr.vmem [resolvable:$true] %s31
      %37 = dma.hbm_to_vmem [thread:$0]  %s30, 2048, %s32, [#allocation6], 128, 128, 8
    $region9: #{tpu_custom_call.1} parent=1 // pred_fallthru
      _
    // Predicated region
    $region10: #{tpu_custom_call.1} parent=1 // pred_check
      _
    $region11: #{tpu_custom_call.1} parent=1 // pred_check_branch
      %39 = sbr.rel (0) target = $region13
    $region12: #{tpu_custom_call.1} parent=1 // pred_region
      %41 = vsyncadd [#allocation6], 0
      %s42 = sshll.u32 %s2, 4
      %s43 = int_to_ptr.hbm [resolvable:$true] %s42
      %s44 = sshll.u32 [#allocation7], 4
      %s45 = int_to_ptr.vmem [resolvable:$true] %s44
      %50 = dma.hbm_to_vmem [thread:$0]  %s43, 2048, %s45, [#allocation6], 128, 128, 8
    $region13: #{tpu_custom_call.1} parent=1 // pred_fallthru
      _
    // Predicated region
    $region14: #{tpu_custom_call.1} parent=1 // pred_check
      _
    $region15: #{tpu_custom_call.1} parent=1 // pred_check_branch
      %52 = sbr.rel (0) target = $region17
    $region16: #{tpu_custom_call.1} parent=1 // pred_region
      %54 = vsyncadd [#allocation9], 0
      %s55 = sshll.u32 %s3, 4
      %s56 = int_to_ptr.hbm [resolvable:$true] %s55
      %s57 = sshll.u32 [#allocation8], 4
      %s58 = int_to_ptr.vmem [resolvable:$true] %s57
      %63 = dma.hbm_to_vmem [thread:$0]  %s56, 2048, %s58, [#allocation9], 128, 128, 8
    $region17: #{tpu_custom_call.1} parent=1 // pred_fallthru
      _
    // Predicated region
    $region18: #{tpu_custom_call.1} parent=1 // pred_check
      _
    $region19: #{tpu_custom_call.1} parent=1 // pred_check_branch
      %65 = sbr.rel (0) target = $region21
    $region20: #{tpu_custom_call.1} parent=1 // pred_region
      %67 = vsyncadd [#allocation9], 0
      %s69 = sshll.u32 %s4, 4
      %s70 = int_to_ptr.hbm [resolvable:$true] %s69
      %s71 = sshll.u32 [#allocation10], 4
      %s72 = int_to_ptr.vmem [resolvable:$true] %s71
      %74 = dma.hbm_to_vmem [thread:$0]  %s70, 64, %s72, [#allocation9]
    $region21: #{tpu_custom_call.1} parent=1 // pred_fallthru
      _
    // Predicated region
    $region22: #{tpu_custom_call.1} parent=1 // pred_check
      _
    $region23: #{tpu_custom_call.1} parent=1 // pred_check_branch
      %76 = sbr.rel (0) target = $region25
    $region24: #{tpu_custom_call.1} parent=1 // pred_region
      %78 = dma.done [#allocation3], 128
    $region25: #{tpu_custom_call.1} parent=1 // pred_fallthru
      _
    // Predicated region
    $region26: #{tpu_custom_call.1} parent=1 // pred_check
      _
    $region27: #{tpu_custom_call.1} parent=1 // pred_check_branch
      %80 = sbr.rel (0) target = $region29
    $region28: #{tpu_custom_call.1} parent=1 // pred_region
      %82 = dma.done [#allocation6], 2048
    $region29: #{tpu_custom_call.1} parent=1 // pred_fallthru
      _
    // Predicated region
    $region30: #{tpu_custom_call.1} parent=1 // pred_check
      _
    $region31: #{tpu_custom_call.1} parent=1 // pred_check_branch
      %84 = sbr.rel (0) target = $region33
    $region32: #{tpu_custom_call.1} parent=1 // pred_region
      %86 = dma.done [#allocation6], 2048
    $region33: #{tpu_custom_call.1} parent=1 // pred_fallthru
      _
    // Predicated region
    $region34: #{tpu_custom_call.1} parent=1 // pred_check
      _
    $region35: #{tpu_custom_call.1} parent=1 // pred_check_branch
      %88 = sbr.rel (0) target = $region37
    $region36: #{tpu_custom_call.1} parent=1 // pred_region
      %90 = dma.done [#allocation9], 2048
    $region37: #{tpu_custom_call.1} parent=1 // pred_fallthru
      _
    // Predicated region
    $region38: #{tpu_custom_call.1} parent=1 // pred_check
      _
    $region39: #{tpu_custom_call.1} parent=1 // pred_check_branch
      %92 = sbr.rel (0) target = $region41
    $region40: #{tpu_custom_call.1} parent=1 // pred_region
      %94 = dma.done [#allocation9], 64
    $region41: #{tpu_custom_call.1} parent=1 // pred_fallthru
      _
    %v95 = vld [vmem:[#allocation2] sm:$0xff]
    %v96 = vld [vmem:[#allocation10] sm:$0x1]
    %v97 = vld [vmem:[#allocation10 + $0x1] sm:$0x1]
    %v98 = vld [vmem:[#allocation10 + $0x2] sm:$0x1]
    %v99 = vld [vmem:[#allocation5] sm:$0xff]
    %v100 = vld [vmem:[#allocation5 + $0x8] sm:$0xff]
    %v101 = vld [vmem:[#allocation5 + $0x10] sm:$0xff]
    %v102 = vld [vmem:[#allocation5 + $0x18] sm:$0xff]
    %v103 = vld [vmem:[#allocation5 + $0x20] sm:$0xff]
    %v104 = vld [vmem:[#allocation5 + $0x28] sm:$0xff]
    %v105 = vld [vmem:[#allocation5 + $0x30] sm:$0xff]
    %v106 = vld [vmem:[#allocation5 + $0x38] sm:$0xff]
    %v107 = vld [vmem:[#allocation5 + $0x40] sm:$0xff]
    %v108 = vld [vmem:[#allocation5 + $0x48] sm:$0xff]
    %v109 = vld [vmem:[#allocation5 + $0x50] sm:$0xff]
    %v110 = vld [vmem:[#allocation5 + $0x58] sm:$0xff]
    %v111 = vld [vmem:[#allocation5 + $0x60] sm:$0xff]
    %v112 = vld [vmem:[#allocation5 + $0x68] sm:$0xff]
    %v113 = vld [vmem:[#allocation5 + $0x70] sm:$0xff]
    %v114 = vld [vmem:[#allocation5 + $0x78] sm:$0xff]
    %v115 = vperm.slane %v96, 0
    %116 = vmatpush.msra.mxu0 %v114
    %117 = vmatpush.msra.mxu0 %v113
    %118 = vmatpush.msra.mxu0 %v112
    %119 = vmatpush.msra.mxu0 %v111
    %120 = vmatpush.msra.mxu0 %v110
    %121 = vmatpush.msra.mxu0 %v109
    %122 = vmatpush.msra.mxu0 %v108
    %123 = vmatpush.msra.mxu0 %v107
    %124 = vmatpush.msra.mxu0 %v106
    %125 = vmatpush.msra.mxu0 %v105
    %126 = vmatpush.msra.mxu0 %v104
    %127 = vmatpush.msra.mxu0 %v103
    %128 = vmatpush.msra.mxu0 %v102
    %129 = vmatpush.msra.mxu0 %v101
    %130 = vmatpush.msra.mxu0 %v100
    %131 = vmatpush.msra.mxu0 %v99
    %132 = vmatmul.f32.gmra.mxu0 %v95
    %v133 = vpop.f32.mrf.mxu0
    %v134 = vadd.f32 %v115, %v133
    %135 = vdwg.mxu0
    %v136 = vmax.f32 %v134, 0.0
    %v137 = vld [vmem:[#allocation7] sm:$0xff]
    %v138 = vld [vmem:[#allocation7 + $0x8] sm:$0xff]
    %v139 = vld [vmem:[#allocation7 + $0x10] sm:$0xff]
    %v140 = vld [vmem:[#allocation7 + $0x18] sm:$0xff]
    %v141 = vld [vmem:[#allocation7 + $0x20] sm:$0xff]
    %v142 = vld [vmem:[#allocation7 + $0x28] sm:$0xff]
    %v143 = vld [vmem:[#allocation7 + $0x30] sm:$0xff]
    %v144 = vld [vmem:[#allocation7 + $0x38] sm:$0xff]
    %v145 = vld [vmem:[#allocation7 + $0x40] sm:$0xff]
    %v146 = vld [vmem:[#allocation7 + $0x48] sm:$0xff]
    %v147 = vld [vmem:[#allocation7 + $0x50] sm:$0xff]
    %v148 = vld [vmem:[#allocation7 + $0x58] sm:$0xff]
    %v149 = vld [vmem:[#allocation7 + $0x60] sm:$0xff]
    %v150 = vld [vmem:[#allocation7 + $0x68] sm:$0xff]
    %v151 = vld [vmem:[#allocation7 + $0x70] sm:$0xff]
    %v152 = vld [vmem:[#allocation7 + $0x78] sm:$0xff]
    %v153 = vperm.slane %v97, 0
    %154 = vmatpush.msra.mxu0 %v152
    %155 = vmatpush.msra.mxu0 %v151
    %156 = vmatpush.msra.mxu0 %v150
    %157 = vmatpush.msra.mxu0 %v149
    %158 = vmatpush.msra.mxu0 %v148
    %159 = vmatpush.msra.mxu0 %v147
    %160 = vmatpush.msra.mxu0 %v146
    %161 = vmatpush.msra.mxu0 %v145
    %162 = vmatpush.msra.mxu0 %v144
    %163 = vmatpush.msra.mxu0 %v143
    %164 = vmatpush.msra.mxu0 %v142
    %165 = vmatpush.msra.mxu0 %v141
    %166 = vmatpush.msra.mxu0 %v140
    %167 = vmatpush.msra.mxu0 %v139
    %168 = vmatpush.msra.mxu0 %v138
    %169 = vmatpush.msra.mxu0 %v137
    %170 = vmatmul.f32.gmra.mxu0 %v136
    %v171 = vpop.f32.mrf.mxu0
    %v172 = vadd.f32 %v153, %v171
    %173 = vdwg.mxu0
    %v174 = vld [vmem:[#allocation8] sm:$0xff]
    %v175 = vld [vmem:[#allocation8 + $0x8] sm:$0xff]
    %v176 = vld [vmem:[#allocation8 + $0x10] sm:$0xff]
    %v177 = vld [vmem:[#allocation8 + $0x18] sm:$0xff]
    %v178 = vld [vmem:[#allocation8 + $0x20] sm:$0xff]
    %v179 = vld [vmem:[#allocation8 + $0x28] sm:$0xff]
    %v180 = vld [vmem:[#allocation8 + $0x30] sm:$0xff]
    %v181 = vld [vmem:[#allocation8 + $0x38] sm:$0xff]
    %v182 = vld [vmem:[#allocation8 + $0x40] sm:$0xff]
    %v183 = vld [vmem:[#allocation8 + $0x48] sm:$0xff]
    %v184 = vld [vmem:[#allocation8 + $0x50] sm:$0xff]
    %v185 = vld [vmem:[#allocation8 + $0x58] sm:$0xff]
    %v186 = vld [vmem:[#allocation8 + $0x60] sm:$0xff]
    %v187 = vld [vmem:[#allocation8 + $0x68] sm:$0xff]
    %v188 = vld [vmem:[#allocation8 + $0x70] sm:$0xff]
    %v189 = vld [vmem:[#allocation8 + $0x78] sm:$0xff]
    %v190 = vperm.slane %v98, 0
    %191 = vmatpush.msra.mxu0 %v189
    %192 = vmatpush.msra.mxu0 %v188
    %193 = vmatpush.msra.mxu0 %v187
    %194 = vmatpush.msra.mxu0 %v186
    %195 = vmatpush.msra.mxu0 %v185
    %196 = vmatpush.msra.mxu0 %v184
    %197 = vmatpush.msra.mxu0 %v183
    %198 = vmatpush.msra.mxu0 %v182
    %199 = vmatpush.msra.mxu0 %v181
    %200 = vmatpush.msra.mxu0 %v180
    %201 = vmatpush.msra.mxu0 %v179
    %202 = vmatpush.msra.mxu0 %v178
    %203 = vmatpush.msra.mxu0 %v177
    %204 = vmatpush.msra.mxu0 %v176
    %205 = vmatpush.msra.mxu0 %v175
    %206 = vmatpush.msra.mxu0 %v174
    %207 = vmatmul.f32.gmra.mxu0 %v172
    %v208 = vpop.f32.mrf.mxu0
    %v209 = vadd.f32 %v190, %v208
    %210 = vdwg.mxu0
    %v211 = vlaneseq
    %v212 = vand.u32 %v211, 127
    %vm213 = vcmp.lt.s32.totalorder %v212, 8
    %v214 = vtanh.pop %v209
    %v215 = vmul.f32 %v209, 1.442695
    %v216 = vpow.pop %v215
    %v217 = vsel %vm213, %v214, %v216
    %218 = vst [vmem:[#allocation11] sm:$0xff] %v217
    // Predicated region
    $region42: #{tpu_custom_call.1} parent=1 // pred_check
      _
    $region43: #{tpu_custom_call.1} parent=1 // pred_check_branch
      %220 = sbr.rel (0) target = $region45
    $region44: #{tpu_custom_call.1} parent=1 // pred_region
      %222 = vsyncadd [#allocation4], 0
      %s224 = sshll.u32 [#allocation11], 4
      %s225 = int_to_ptr.vmem [resolvable:$true] %s224
      %s226 = sshll.u32 %s5, 4
      %s227 = int_to_ptr.hbm [resolvable:$true] %s226
      %229 = dma.vmem_to_hbm [thread:$0]  %s225, 128, %s227, [#allocation4]
    $region45: #{tpu_custom_call.1} parent=1 // pred_fallthru
      _
    // Predicated region
    $region46: #{tpu_custom_call.1} parent=1 // pred_check
      _
    $region47: #{tpu_custom_call.1} parent=1 // pred_check_branch
      %231 = sbr.rel (0) target = $region49
    $region48: #{tpu_custom_call.1} parent=1 // pred_region
      %233 = dma.done [#allocation4], 128
    $region49: #{tpu_custom_call.1} parent=1 // pred_fallthru
      _
    %234 = vsyncpa [#allocation3], 1
    %235 = vsyncpa [#allocation6], 1
    %236 = vsyncpa [#allocation9], 1
    %237 = vsyncpa [#allocation4], 1

</llo_original>
